<compile_context>
chip_gen: v7x
topology: tpu7x:2x2x1
jax: 0.10.0
libtpu: 0.0.40
codegen_flags: <defaults>
</compile_context>

<pallas_src>
import jax
import jax.numpy as jnp
from jax import lax
from jax.experimental import pallas as pl
from jax.experimental.pallas import tpu as pltpu


def _round_up(x, m):
    return ((x + m - 1) // m) * m


def _layer_salt(layer_idx):
    # Distinct positive int32 salt per layer so fused layers get independent masks.
    return ((layer_idx + 1) * 0x9E3779B1) & 0x7FFFFFFF


def _make_prenet_kernel(*, n_layers, n_units, tile_m, dropout_rate):
    """Build the fused n-layer prenet kernel (all sizes static)."""
    if not (0.0 <= dropout_rate < 1.0):
        raise ValueError("dropout_rate must be in [0, 1)")
    thresh = int(round(dropout_rate * (1 << 24)))   # integer dropout threshold

    def kernel(seed_ref, x_ref, w0_ref, b0_ref, wr_ref, br_ref, o_ref):
        seed = seed_ref[0]
        row0 = pl.program_id(0) * tile_m          # global row offset of this tile

        # Element counter, shared by all layers of this tile (hoisted: 2 iotas total).
        shape = (tile_m, n_units)
        rows = lax.broadcasted_iota(jnp.int32, shape, 0) + row0
        cols = lax.broadcasted_iota(jnp.int32, shape, 1)
        idx = rows * jnp.int32(n_units) + cols

        def dropout(h, layer_idx):
            if thresh == 0:                        # p == 0: keep everything
                return h
            # Stateless xorshift-multiply hash -> 24 uniform bits -> integer
            # threshold compare (no uint->float conversion, no scale multiply:
            # the 1/(1-p) scale is pre-folded into the weights/biases).
            v = idx ^ (seed + jnp.int32(_layer_salt(layer_idx)))
            v = (v ^ lax.shift_right_logical(v, 16)) * jnp.int32(0x45D9F3B)
            v = (v ^ lax.shift_right_logical(v, 16)) * jnp.int32(0x45D9F3B)
            v = v ^ lax.shift_right_logical(v, 16)
            keep = (v & jnp.int32(0x00FFFFFF)) >= jnp.int32(thresh)
            return jnp.where(keep, h, 0.0)

        # ---- layer 0: bf16 matmul (f32 acc) + bias + ReLU + dropout ----------
        h = jnp.dot(x_ref[...].astype(jnp.bfloat16), w0_ref[...],
                    preferred_element_type=jnp.float32)
        h = jnp.maximum(h + b0_ref[...], 0.0)
        h = dropout(h, 0)

        # ---- layers 1..n-1: intermediate stays on-chip, never written to HBM -
        for j in range(n_layers - 1):
            h = jnp.dot(h.astype(jnp.bfloat16), wr_ref[j],
                        preferred_element_type=jnp.float32)
            h = jnp.maximum(h + br_ref[j], 0.0)
            h = dropout(h, j + 1)

        o_ref[...] = h

    return kernel


def prenet_forward(x, params, *, dropout_rate=0.5, seed=0, tile_m=512):
    """Prenet forward: x (B, ..., idim) -> (B, ..., n_units), dropout always on.

    params: list of (w, b) with w (in_features, out_features), b (out_features,).
            The 1/(1-p) inverted-dropout scale must already be folded into the
            parameters (see init_prenet_params).
    seed:   int32 dropout seed; vary it per step to draw fresh masks.
    """
    if not (0.0 <= dropout_rate < 1.0):
        raise ValueError("dropout_rate must be in [0, 1)")
    n_layers = len(params)
    idim = x.shape[-1]
    n_units = params[-1][0].shape[1]
    lead_shape = x.shape[:-1]

    x2d = x.reshape(-1, idim).astype(jnp.float32)
    m = x2d.shape[0]

    # Row tiling: multiple of 8 sublanes; 512-2048 keeps f32 streaming near the
    # HBM roofline while fitting scoped-VMEM defaults on v5e/v6e/v7x.
    tile = min(tile_m, _round_up(m, 8))
    tile = max(8, _round_up(tile, 8))
    m_pad = _round_up(m, tile)
    if m_pad != m:
        x2d = jnp.pad(x2d, ((0, m_pad - m), (0, 0)))
    grid_m = m_pad // tile

    # Weights as bf16 MXU operands (f32 accumulation); biases stay f32.
    w0 = params[0][0].astype(jnp.bfloat16)
    b0 = params[0][1].astype(jnp.float32).reshape(1, n_units)
    if n_layers > 1:
        wr = jnp.stack([w for (w, _) in params[1:]]).astype(jnp.bfloat16)
        br = jnp.stack([b for (_, b) in params[1:]]).astype(jnp.float32)[:, None, :]
    else:  # dummy, never read (static in-kernel loop has zero iterations)
        wr = jnp.zeros((1, n_units, n_units), jnp.bfloat16)
        br = jnp.zeros((1, 1, n_units), jnp.float32)

    seed_arr = jnp.asarray(seed, dtype=jnp.int32).reshape((1,))

    kernel = _make_prenet_kernel(n_layers=n_layers, n_units=n_units,
                                 tile_m=tile, dropout_rate=dropout_rate)

    out = pl.pallas_call(
        kernel,
        out_shape=jax.ShapeDtypeStruct((m_pad, n_units), jnp.float32),
        grid=(grid_m,),
        in_specs=[
            pl.BlockSpec(memory_space=pltpu.MemorySpace.SMEM),   # seed (scalar)
            pl.BlockSpec((tile, idim), lambda i: (i, 0)),        # x: streamed
            pl.BlockSpec(w0.shape, lambda i: (0, 0)),            # weights stay
            pl.BlockSpec(b0.shape, lambda i: (0, 0)),            #   VMEM-resident
            pl.BlockSpec(wr.shape, lambda i: (0, 0, 0)),
            pl.BlockSpec(br.shape, lambda i: (0, 0, 0)),
        ],
        out_specs=pl.BlockSpec((tile, n_units), lambda i: (i, 0)),
        compiler_params=pltpu.CompilerParams(
            dimension_semantics=("parallel",)),                  # v7x: 2 TCs split M
    )(seed_arr, x2d, w0, b0, wr, br)

    if m_pad != m:
        out = out[:m]
    return out.reshape(*lead_shape, n_units)


def init_prenet_params(key, idim, n_layers=2, n_units=256, dropout_rate=0.5):
    """torch.nn.Linear-style init (uniform +-1/sqrt(fan_in)).

    The 1/(1-p) inverted-dropout survivor scale is folded into (w, b) ONCE here
    (ReLU commutes with a positive scale), so the kernel's dropout is a bare
    select with no per-element multiply.
    """
    if not (0.0 <= dropout_rate < 1.0):
        raise ValueError("dropout_rate must be in [0, 1)")
    inv_keep = 1.0 / (1.0 - dropout_rate)
    params = []
    for layer in range(n_layers):
        n_in = idim if layer == 0 else n_units
        key, kw, kb = jax.random.split(key, 3)
        bound = float(n_in) ** -0.5
        w = jax.random.uniform(kw, (n_in, n_units), jnp.float32, -bound, bound)
        b = jax.random.uniform(kb, (n_units,), jnp.float32, -bound, bound)
        params.append((w * inv_keep, b * inv_keep))
    return params


if __name__ == "__main__":
    key = jax.random.PRNGKey(0)
    k_x, k_p = jax.random.split(key)

    B, T, idim = 2, 8, 32
    n_layers, n_units, dropout_rate = 2, 128, 0.5

    x = jax.random.normal(k_x, (B, T, idim), dtype=jnp.float32)
    params = init_prenet_params(k_p, idim, n_layers=n_layers, n_units=n_units,
                                dropout_rate=dropout_rate)

    y = prenet_forward(x, params, dropout_rate=dropout_rate, seed=1234)
    y = jax.block_until_ready(y)

    assert y.shape == (B, T, n_units), y.shape
    assert y.dtype == jnp.float32
    assert bool(jnp.all(jnp.isfinite(y)))
    assert bool(jnp.all(y >= 0.0))            # ReLU + zeroing only -> non-negative
    zero_frac = float(jnp.mean(y == 0.0))     # ~0.75 expected (ReLU ~0.5, dropout 0.5)
    assert 0.4 < zero_frac < 0.95, zero_frac
    print("KERNEL_OK")
</pallas_src>

<mosaic_0001>
module attributes {stable_mosaic.version = 11 : i64} {
  func.func @kernel(%arg0: i32, %arg1: memref<1xi32, #tpu.memory_space<smem>>, %arg2: memref<16x32xf32, #tpu.memory_space<vmem>>, %arg3: memref<32x128xbf16, #tpu.memory_space<vmem>>, %arg4: memref<1x128xf32, #tpu.memory_space<vmem>>, %arg5: memref<1x128x128xbf16, #tpu.memory_space<vmem>>, %arg6: memref<1x1x128xf32, #tpu.memory_space<vmem>>, %arg7: memref<16x128xf32, #tpu.memory_space<vmem>>) attributes {dimension_semantics = [#tpu.dimension_semantics<parallel>], iteration_bounds = array<i64: 1>, scalar_prefetch = 0 : i64, scratch_operands = 0 : i64, tpu.core_type = #tpu.core_type<tc>, window_params = [{transform_indices = @transform_0, window_bounds = array<i64: 1>}, {transform_indices = @transform_1, window_bounds = array<i64: 16, 32>}, {pipeline_mode = #tpu.pipeline_mode<synchronous>, transform_indices = @transform_2, window_bounds = array<i64: 32, 128>}, {pipeline_mode = #tpu.pipeline_mode<synchronous>, transform_indices = @transform_3, window_bounds = array<i64: 1, 128>}, {pipeline_mode = #tpu.pipeline_mode<synchronous>, transform_indices = @transform_4, window_bounds = array<i64: 1, 128, 128>}, {pipeline_mode = #tpu.pipeline_mode<synchronous>, transform_indices = @transform_5, window_bounds = array<i64: 1, 1, 128>}, {transform_indices = @transform_6, window_bounds = array<i64: 16, 128>}]} {
    %c0 = arith.constant 0 : index
    %0 = memref.load %arg1[%c0] : memref<1xi32, #tpu.memory_space<smem>>
    %c16_i32 = arith.constant 16 : i32
    %1 = arith.muli %arg0, %c16_i32 : i32
    %2 = tpu.iota {dimensions = array<i32: 0>} : vector<16x128xi32>
    %3 = vector.broadcast %1 : i32 to vector<16x128xi32>
    %4 = arith.addi %2, %3 : vector<16x128xi32>
    %5 = tpu.iota {dimensions = array<i32: 1>} : vector<16x128xi32>
    %c128_i32 = arith.constant 128 : i32
    %6 = vector.broadcast %c128_i32 : i32 to vector<16x128xi32>
    %7 = arith.muli %4, %6 : vector<16x128xi32>
    %8 = arith.addi %7, %5 : vector<16x128xi32>
    %c0_0 = arith.constant 0 : index
    %c0_1 = arith.constant 0 : index
    %9 = vector.load %arg2[%c0_0, %c0_1] : memref<16x32xf32, #tpu.memory_space<vmem>>, vector<16x32xf32>
    %10 = arith.truncf %9 : vector<16x32xf32> to vector<16x32xbf16>
    %c0_2 = arith.constant 0 : index
    %c0_3 = arith.constant 0 : index
    %11 = vector.load %arg3[%c0_2, %c0_3] : memref<32x128xbf16, #tpu.memory_space<vmem>>, vector<32x128xbf16>
    %cst = arith.constant dense<0.000000e+00> : vector<16x128xf32>
    %12 = tpu.matmul %10, %11, %cst {dimension_numbers = #tpu.dot_dimension_numbers<[1], [0], [0], [1], [0, 0, 1, 1], [], []>} : vector<16x32xbf16>, vector<32x128xbf16>, vector<16x128xf32> -> vector<16x128xf32>
    %c0_4 = arith.constant 0 : index
    %c0_5 = arith.constant 0 : index
    %13 = vector.load %arg4[%c0_4, %c0_5] : memref<1x128xf32, #tpu.memory_space<vmem>>, vector<1x128xf32>
    %14 = vector.broadcast %13 : vector<1x128xf32> to vector<16x128xf32>
    %15 = arith.addf %12, %14 : vector<16x128xf32>
    %cst_6 = arith.constant 0.000000e+00 : f32
    %16 = vector.broadcast %cst_6 : f32 to vector<16x128xf32>
    %17 = arith.maximumf %15, %16 : vector<16x128xf32>
    %c506952113_i32 = arith.constant 506952113 : i32
    %18 = arith.addi %0, %c506952113_i32 : i32
    %19 = vector.broadcast %18 : i32 to vector<16x128xi32>
    %20 = arith.xori %8, %19 : vector<16x128xi32>
    %c16_i32_7 = arith.constant 16 : i32
    %21 = vector.broadcast %c16_i32_7 : i32 to vector<16x128xi32>
    %22 = arith.shrui %20, %21 : vector<16x128xi32>
    %23 = arith.xori %20, %22 : vector<16x128xi32>
    %c73244475_i32 = arith.constant 73244475 : i32
    %24 = vector.broadcast %c73244475_i32 : i32 to vector<16x128xi32>
    %25 = arith.muli %23, %24 : vector<16x128xi32>
    %c16_i32_8 = arith.constant 16 : i32
    %26 = vector.broadcast %c16_i32_8 : i32 to vector<16x128xi32>
    %27 = arith.shrui %25, %26 : vector<16x128xi32>
    %28 = arith.xori %25, %27 : vector<16x128xi32>
    %c73244475_i32_9 = arith.constant 73244475 : i32
    %29 = vector.broadcast %c73244475_i32_9 : i32 to vector<16x128xi32>
    %30 = arith.muli %28, %29 : vector<16x128xi32>
    %c16_i32_10 = arith.constant 16 : i32
    %31 = vector.broadcast %c16_i32_10 : i32 to vector<16x128xi32>
    %32 = arith.shrui %30, %31 : vector<16x128xi32>
    %33 = arith.xori %30, %32 : vector<16x128xi32>
    %c16777215_i32 = arith.constant 16777215 : i32
    %34 = vector.broadcast %c16777215_i32 : i32 to vector<16x128xi32>
    %35 = arith.andi %33, %34 : vector<16x128xi32>
    %c8388608_i32 = arith.constant 8388608 : i32
    %36 = vector.broadcast %c8388608_i32 : i32 to vector<16x128xi32>
    %37 = arith.cmpi sge, %35, %36 : vector<16x128xi32>
    %cst_11 = arith.constant 0.000000e+00 : f32
    %38 = vector.broadcast %cst_11 : f32 to vector<16x128xf32>
    %39 = arith.select %37, %17, %38 : vector<16x128xi1>, vector<16x128xf32>
    %40 = arith.truncf %39 : vector<16x128xf32> to vector<16x128xbf16>
    %c0_12 = arith.constant 0 : index
    %c0_13 = arith.constant 0 : index
    %c0_14 = arith.constant 0 : index
    %41 = vector.load %arg5[%c0_12, %c0_13, %c0_14] : memref<1x128x128xbf16, #tpu.memory_space<vmem>>, vector<1x128x128xbf16>
    %42 = vector.shape_cast %41 : vector<1x128x128xbf16> to vector<128x128xbf16>
    %cst_15 = arith.constant dense<0.000000e+00> : vector<16x128xf32>
    %43 = tpu.matmul %40, %42, %cst_15 {dimension_numbers = #tpu.dot_dimension_numbers<[1], [0], [0], [1], [0, 0, 1, 1], [], []>} : vector<16x128xbf16>, vector<128x128xbf16>, vector<16x128xf32> -> vector<16x128xf32>
    %c0_16 = arith.constant 0 : index
    %c0_17 = arith.constant 0 : index
    %c0_18 = arith.constant 0 : index
    %44 = vector.load %arg6[%c0_16, %c0_17, %c0_18] : memref<1x1x128xf32, #tpu.memory_space<vmem>>, vector<1x1x128xf32>
    %45 = vector.shape_cast %44 : vector<1x1x128xf32> to vector<1x128xf32>
    %46 = vector.broadcast %45 : vector<1x128xf32> to vector<16x128xf32>
    %47 = arith.addf %43, %46 : vector<16x128xf32>
    %cst_19 = arith.constant 0.000000e+00 : f32
    %48 = vector.broadcast %cst_19 : f32 to vector<16x128xf32>
    %49 = arith.maximumf %47, %48 : vector<16x128xf32>
    %c1013904226_i32 = arith.constant 1013904226 : i32
    %50 = arith.addi %0, %c1013904226_i32 : i32
    %51 = vector.broadcast %50 : i32 to vector<16x128xi32>
    %52 = arith.xori %8, %51 : vector<16x128xi32>
    %c16_i32_20 = arith.constant 16 : i32
    %53 = vector.broadcast %c16_i32_20 : i32 to vector<16x128xi32>
    %54 = arith.shrui %52, %53 : vector<16x128xi32>
    %55 = arith.xori %52, %54 : vector<16x128xi32>
    %c73244475_i32_21 = arith.constant 73244475 : i32
    %56 = vector.broadcast %c73244475_i32_21 : i32 to vector<16x128xi32>
    %57 = arith.muli %55, %56 : vector<16x128xi32>
    %c16_i32_22 = arith.constant 16 : i32
    %58 = vector.broadcast %c16_i32_22 : i32 to vector<16x128xi32>
    %59 = arith.shrui %57, %58 : vector<16x128xi32>
    %60 = arith.xori %57, %59 : vector<16x128xi32>
    %c73244475_i32_23 = arith.constant 73244475 : i32
    %61 = vector.broadcast %c73244475_i32_23 : i32 to vector<16x128xi32>
    %62 = arith.muli %60, %61 : vector<16x128xi32>
    %c16_i32_24 = arith.constant 16 : i32
    %63 = vector.broadcast %c16_i32_24 : i32 to vector<16x128xi32>
    %64 = arith.shrui %62, %63 : vector<16x128xi32>
    %65 = arith.xori %62, %64 : vector<16x128xi32>
    %c16777215_i32_25 = arith.constant 16777215 : i32
    %66 = vector.broadcast %c16777215_i32_25 : i32 to vector<16x128xi32>
    %67 = arith.andi %65, %66 : vector<16x128xi32>
    %c8388608_i32_26 = arith.constant 8388608 : i32
    %68 = vector.broadcast %c8388608_i32_26 : i32 to vector<16x128xi32>
    %69 = arith.cmpi sge, %67, %68 : vector<16x128xi32>
    %cst_27 = arith.constant 0.000000e+00 : f32
    %70 = vector.broadcast %cst_27 : f32 to vector<16x128xf32>
    %71 = arith.select %69, %49, %70 : vector<16x128xi1>, vector<16x128xf32>
    %c0_28 = arith.constant 0 : index
    %c0_29 = arith.constant 0 : index
    %72 = vector.load %arg7[%c0_28, %c0_29] : memref<16x128xf32, #tpu.memory_space<vmem>>, vector<16x128xf32>
    tpu.vector_store %arg7[%c0_28, %c0_29], %71 {strides = array<i32>} : memref<16x128xf32, #tpu.memory_space<vmem>>, vector<16x128xf32>,
    return
  }
  func.func @transform_0(%arg0: i32) -> i32 {
    %c0_i32 = arith.constant 0 : i32
    %c0_i32_0 = arith.constant 0 : i32
    return %c0_i32 : i32
  }
  func.func @transform_1(%arg0: i32) -> (i32, i32) {
    %c0_i32 = arith.constant 0 : i32
    %c0_i32_0 = arith.constant 0 : i32
    return %arg0, %c0_i32 : i32, i32
  }
  func.func @transform_2(%arg0: i32) -> (i32, i32) {
    %c0_i32 = arith.constant 0 : i32
    %c0_i32_0 = arith.constant 0 : i32
    %c0_i32_1 = arith.constant 0 : i32
    return %c0_i32, %c0_i32_0 : i32, i32
  }
  func.func @transform_3(%arg0: i32) -> (i32, i32) {
    %c0_i32 = arith.constant 0 : i32
    %c0_i32_0 = arith.constant 0 : i32
    %c0_i32_1 = arith.constant 0 : i32
    return %c0_i32, %c0_i32_0 : i32, i32
  }
  func.func @transform_4(%arg0: i32) -> (i32, i32, i32) {
    %c0_i32 = arith.constant 0 : i32
    %c0_i32_0 = arith.constant 0 : i32
    %c0_i32_1 = arith.constant 0 : i32
    %c0_i32_2 = arith.constant 0 : i32
    return %c0_i32, %c0_i32_0, %c0_i32_1 : i32, i32, i32
  }
  func.func @transform_5(%arg0: i32) -> (i32, i32, i32) {
    %c0_i32 = arith.constant 0 : i32
    %c0_i32_0 = arith.constant 0 : i32
    %c0_i32_1 = arith.constant 0 : i32
    %c0_i32_2 = arith.constant 0 : i32
    return %c0_i32, %c0_i32_0, %c0_i32_1 : i32, i32, i32
  }
  func.func @transform_6(%arg0: i32) -> (i32, i32) {
    %c0_i32 = arith.constant 0 : i32
    %c0_i32_0 = arith.constant 0 : i32
    return %arg0, %c0_i32 : i32, i32
  }
}

</mosaic_0001>

<llo_original>
// kernel: tpu_custom_call.1
$region0: #{tpu_custom_call.1}
  #allocation0 [shape = 'u32[]', space=smem, size = 0x4, offset = 0x4, fixed_abs, tag = 'smem constant byte address 0x4 - core index']
  #allocation1 [shape = 'u32[144,128]{1,0:T(1,128)}', space=vmem, size = 0x12000, scoped, tag = 'internal scratch']
  #allocation2 [shape = 's32[1]{0:T(128)S(6)}', space=smem, size = 0x200, scoped, tag = 'scoped memory for tpu_custom_call.1']
  %s0 = inlined_call_operand.<no memory space> [shape: s32[1], index: 0, kind: input, shape index: {}]
  %s1 = inlined_call_operand.hbm [shape: f32[16,32], index: 1, kind: input, shape index: {}]
  %s2 = inlined_call_operand.hbm [shape: bf16[32,128], index: 2, kind: input, shape index: {}]
  %s3 = inlined_call_operand.vmem [shape: f32[1,128], index: 3, kind: input, shape index: {}]
  %s4 = inlined_call_operand.hbm [shape: bf16[1,128,128], index: 4, kind: input, shape index: {}]
  %s5 = inlined_call_operand.vmem [shape: f32[1,1,128], index: 5, kind: input, shape index: {}]
  %s6 = inlined_call_operand.hbm [shape: f32[16,128], index: 6, kind: output, shape index: {}]
  %s7 = sld [smem:[#allocation0]]
  $region46: #{tpu_custom_call.1} parent=0
    _
  %s9 = ssub.s32 1, %s7
  %s10 = scalar_select 0, %s9, %s7
  %11 = sst [smem:[#allocation2]] %s0
  $region1: #{tpu_custom_call.1} parent=0
    #allocation3 [shape = 'u8[8192]{0}', space=vmem, size = 0x2000, scoped, tag = 'input window, operand 1, single buffered']
    #allocation4 [shape = 's32[1]{0}', space=sflag, size = 0x4, scoped, tag = 'scoped memory for tpu_custom_call.1']
    #allocation5 [shape = 's32[1]{0}', space=sflag, size = 0x4, scoped, tag = 'scoped memory for tpu_custom_call.1']
    #allocation6 [shape = 'u8[8192]{0}', space=vmem, size = 0x2000, scoped, tag = 'input window, operand 2, single buffered']
    #allocation7 [shape = 's32[1]{0}', space=sflag, size = 0x4, scoped, tag = 'scoped memory for tpu_custom_call.1']
    #allocation8 [shape = 'u8[32768]{0}', space=vmem, size = 0x8000, scoped, tag = 'input window, operand 4, single buffered']
    #allocation9 [shape = 'u8[8192]{0}', space=vmem, size = 0x2000, scoped, tag = 'output window, operand 0, single buffered']
    %12 = vsyncpa [#allocation4], 0
    %13 = vsyncpa [#allocation7], 0
    %14 = vsyncpa [#allocation5], 0
    // Predicated region
    $region2: #{tpu_custom_call.1} parent=1 // pred_check
      _
    $region3: #{tpu_custom_call.1} parent=1 // pred_check_branch
      %16 = sbr.rel (0) target = $region5
    $region4: #{tpu_custom_call.1} parent=1 // pred_region
      _
    $region5: #{tpu_custom_call.1} parent=1 // pred_fallthru
      _
    // Predicated region
    $region6: #{tpu_custom_call.1} parent=1 // pred_check
      _
    $region7: #{tpu_custom_call.1} parent=1 // pred_check_branch
      %18 = sbr.rel (0) target = $region9
    $region8: #{tpu_custom_call.1} parent=1 // pred_region
      %s20 = ssub.s32 256, 256
      %21 = vsyncadd [#allocation4], %s20
      %s22 = sshll.u32 [#allocation3], 4
      %s23 = int_to_ptr.vmem [resolvable:$true] %s22
      %28 = dma.hbm_to_vmem [thread:$0]  %s1, 256, %s23, [#allocation4], 128, 128, 8
    $region9: #{tpu_custom_call.1} parent=1 // pred_fallthru
      _
    // Predicated region
    $region10: #{tpu_custom_call.1} parent=1 // pred_check
      _
    $region11: #{tpu_custom_call.1} parent=1 // pred_check_branch
      %30 = sbr.rel (0) target = $region13
    $region12: #{tpu_custom_call.1} parent=1 // pred_region
      %s32 = ssub.s32 256, 256
      %33 = vsyncadd [#allocation7], %s32
      %s34 = sshll.u32 [#allocation6], 4
      %s35 = int_to_ptr.vmem [resolvable:$true] %s34
      %40 = dma.hbm_to_vmem [thread:$0]  %s2, 256, %s35, [#allocation7], 64, 64, 4
    $region13: #{tpu_custom_call.1} parent=1 // pred_fallthru
      _
    // Predicated region
    $region14: #{tpu_custom_call.1} parent=1 // pred_check
      _
    $region15: #{tpu_custom_call.1} parent=1 // pred_check_branch
      %42 = sbr.rel (0) target = $region17
    $region16: #{tpu_custom_call.1} parent=1 // pred_region
      _
    $region17: #{tpu_custom_call.1} parent=1 // pred_fallthru
      _
    // Predicated region
    $region18: #{tpu_custom_call.1} parent=1 // pred_check
      _
    $region19: #{tpu_custom_call.1} parent=1 // pred_check_branch
      %44 = sbr.rel (0) target = $region21
    $region20: #{tpu_custom_call.1} parent=1 // pred_region
      %s46 = ssub.s32 1024, 1024
      %47 = vsyncadd [#allocation7], %s46
      %s48 = sshll.u32 [#allocation8], 4
      %s49 = int_to_ptr.vmem [resolvable:$true] %s48
      %54 = dma.hbm_to_vmem [thread:$0]  %s4, 1024, %s49, [#allocation7], 64, 64, 4
    $region21: #{tpu_custom_call.1} parent=1 // pred_fallthru
      _
    // Predicated region
    $region22: #{tpu_custom_call.1} parent=1 // pred_check
      _
    $region23: #{tpu_custom_call.1} parent=1 // pred_check_branch
      %56 = sbr.rel (0) target = $region25
    $region24: #{tpu_custom_call.1} parent=1 // pred_region
      _
    $region25: #{tpu_custom_call.1} parent=1 // pred_fallthru
      _
    // Predicated region
    $region26: #{tpu_custom_call.1} parent=1 // pred_check
      _
    $region27: #{tpu_custom_call.1} parent=1 // pred_check_branch
      %58 = sbr.rel (0) target = $region29
    $region28: #{tpu_custom_call.1} parent=1 // pred_region
      %59 = dma.done [#allocation4], 256
    $region29: #{tpu_custom_call.1} parent=1 // pred_fallthru
      _
    // Predicated region
    $region30: #{tpu_custom_call.1} parent=1 // pred_check
      _
    $region31: #{tpu_custom_call.1} parent=1 // pred_check_branch
      %61 = sbr.rel (0) target = $region33
    $region32: #{tpu_custom_call.1} parent=1 // pred_region
      %62 = dma.done [#allocation7], 256
    $region33: #{tpu_custom_call.1} parent=1 // pred_fallthru
      _
    // Predicated region
    $region34: #{tpu_custom_call.1} parent=1 // pred_check
      _
    $region35: #{tpu_custom_call.1} parent=1 // pred_check_branch
      %64 = sbr.rel (0) target = $region37
    $region36: #{tpu_custom_call.1} parent=1 // pred_region
      %65 = dma.done [#allocation7], 1024
    $region37: #{tpu_custom_call.1} parent=1 // pred_fallthru
      _
    %s67 = sld [smem:[#allocation2]]
    %s68 = smul.u32 0, 16
    %v69 = vlaneseq
    %v70 = vshrl.u32 %v69, 7
    %v71 = vadd.s32 %v70, 8
    %v72 = vstv %s68
    %v73 = vadd.s32 %v70, %v72
    %v74 = vadd.s32 %v71, %v72
    %v75 = vlaneseq
    %v76 = vand.u32 %v75, 127
    %v77 = vmul.u32 %v73, 128
    %v78 = vmul.u32 %v74, 128
    %v79 = vadd.s32 %v77, %v76
    %v80 = vadd.s32 %v78, %v76
    %v81 = vld [vmem:[#allocation3] sm:$0xff]
    %v82 = vld [vmem:[#allocation3 + $0x8] sm:$0xff]
    %v83 = vpack.c.bf16 %v82, %v81
    %v84 = vld [vmem:[#allocation6] sm:$0xf]
    %v85 = vld [vmem:[#allocation6 + $0x4] sm:$0xf]
    %v86 = vld [vmem:[#allocation6 + $0x8] sm:$0xf]
    %v87 = vld [vmem:[#allocation6 + $0xc] sm:$0xf]
    %v88 = vld [vmem:[%s3] sm:$0x1]
    %v90 = vlaneseq
    %v91 = vshrl.u32 %v90, 7
    %v92 = vsub.s32 0, %v91
    %v93 = vrot.slane %v88, %v92
    %v99 = vunpack.c.l.b16 %v84
    %v100 = vunpack.c.l.b16 %v85
    %v101 = vunpack.c.l.b16 %v86
    %v102 = vunpack.c.l.b16 %v87
    %v103 = vpack.c.b16 %v100, %v99
    %v104 = vpack.c.b16 %v102, %v101
    %vm107 = vcmask 261120
    %v109 = vsel %vm107, %v83, 0
    %111 = vmatprep.subr.bf16.mxu0 0
    %112 = vmatpush1.bf16.msra.mxu0 %v103
    %113 = vmatprep.subr.bf16.mxu0 0
    %114 = vmatpush1.bf16.msra.mxu0 %v104
    %115 = vmatprep.subr.bf16.mxu0 0
    %116 = vmatpush1.bf16.msra.mxu0 0
    %117 = vmatprep.subr.bf16.mxu0 0
    %118 = vmatpush1.bf16.msra.mxu0 0
    %119 = vmatprep.subr.bf16.mxu0 0
    %120 = vmatpush1.bf16.msra.mxu0 0
    %121 = vmatprep.subr.bf16.mxu0 0
    %122 = vmatpush1.bf16.msra.mxu0 0
    %123 = vmatprep.subr.bf16.mxu0 0
    %124 = vmatpush1.bf16.msra.mxu0 0
    %125 = vmatprep.subr.bf16.mxu0 0
    %126 = vmatpush1.bf16.msra.mxu0 0
    %127 = vmatprep.subr.bf16.mxu0 0
    %128 = vmatpush1.bf16.msra.mxu0 0
    %129 = vmatprep.subr.bf16.mxu0 0
    %130 = vmatpush1.bf16.msra.mxu0 0
    %131 = vmatprep.subr.bf16.mxu0 0
    %132 = vmatpush1.bf16.msra.mxu0 0
    %133 = vmatprep.subr.bf16.mxu0 0
    %134 = vmatpush1.bf16.msra.mxu0 0
    %135 = vmatprep.subr.bf16.mxu0 0
    %136 = vmatpush1.bf16.msra.mxu0 0
    %137 = vmatprep.subr.bf16.mxu0 0
    %138 = vmatpush1.bf16.msra.mxu0 0
    %139 = vmatprep.subr.bf16.mxu0 0
    %140 = vmatpush1.bf16.msra.mxu0 0
    %141 = vmatprep.subr.bf16.mxu0 0
    %142 = vmatpush1.bf16.msra.mxu0 0
    %143 = vmatprep.mubr.bf16.mxu0 0
    %144 = vmatmul.mubr.bf16.gmra.mrb[0].mxu0 %v109
    %v145 = vpop.f32.mrb[0].mxu0
    %v146 = vadd.f32 %v93, %v145
    %v147 = vpop.f32.mrb[0].mxu0
    %v148 = vpop.f32.mrb[0].mxu0
    %v149 = vadd.f32 %v93, %v148
    %v150 = vpop.f32.mrb[0].mxu0
    %151 = vdwg.mxu0
    %v152 = vmax.f32 %v146, 0.0
    %v153 = vmax.f32 %v149, 0.0
    %s154 = sadd.s32 %s67, 506952113
    %v155 = vstv %s154
    %v156 = vxor.u32 %v79, %v155
    %v157 = vxor.u32 %v80, %v155
    %v158 = vshrl.u32 %v156, 16
    %v159 = vshrl.u32 %v157, 16
    %v160 = vxor.u32 %v156, %v158
    %v161 = vxor.u32 %v157, %v159
    %v162 = vmul.u32 %v160, 73244475
    %v163 = vmul.u32 %v161, 73244475
    %v164 = vshrl.u32 %v162, 16
    %v165 = vshrl.u32 %v163, 16
    %v166 = vxor.u32 %v162, %v164
    %v167 = vxor.u32 %v163, %v165
    %v168 = vmul.u32 %v166, 73244475
    %v169 = vmul.u32 %v167, 73244475
    %v170 = vshrl.u32 %v168, 16
    %v171 = vshrl.u32 %v169, 16
    %v172 = vxor.u32 %v168, %v170
    %v173 = vxor.u32 %v169, %v171
    %v174 = vand.u32 %v172, 16777215
    %v175 = vand.u32 %v173, 16777215
    %vm176 = vcmp.ge.s32.totalorder %v174, 8388608
    %vm177 = vcmp.ge.s32.totalorder %v175, 8388608
    %v178 = vsel %vm176, %v152, 0.0
    %v179 = vsel %vm177, %v153, 0.0
    %v180 = vpack.c.bf16 %v179, %v178
    %v181 = vld [vmem:[#allocation8] sm:$0xf]
    %v182 = vld [vmem:[#allocation8 + $0x4] sm:$0xf]
    %v183 = vld [vmem:[#allocation8 + $0x8] sm:$0xf]
    %v184 = vld [vmem:[#allocation8 + $0xc] sm:$0xf]
    %v185 = vld [vmem:[#allocation8 + $0x10] sm:$0xf]
    %v186 = vld [vmem:[#allocation8 + $0x14] sm:$0xf]
    %v187 = vld [vmem:[#allocation8 + $0x18] sm:$0xf]
    %v188 = vld [vmem:[#allocation8 + $0x1c] sm:$0xf]
    %v189 = vld [vmem:[#allocation8 + $0x20] sm:$0xf]
    %v190 = vld [vmem:[#allocation8 + $0x24] sm:$0xf]
    %v191 = vld [vmem:[#allocation8 + $0x28] sm:$0xf]
    %v192 = vld [vmem:[#allocation8 + $0x2c] sm:$0xf]
    %v193 = vld [vmem:[#allocation8 + $0x30] sm:$0xf]
    %v194 = vld [vmem:[#allocation8 + $0x34] sm:$0xf]
    %v195 = vld [vmem:[#allocation8 + $0x38] sm:$0xf]
    %v196 = vld [vmem:[#allocation8 + $0x3c] sm:$0xf]
    %v197 = vld [vmem:[%s5] sm:$0x1]
    %v199 = vlaneseq
    %v200 = vshrl.u32 %v199, 7
    %v201 = vsub.s32 0, %v200
    %v202 = vrot.slane %v197, %v201
    %v220 = vunpack.c.l.b16 %v181
    %v221 = vunpack.c.l.b16 %v182
    %v222 = vunpack.c.l.b16 %v183
    %v223 = vunpack.c.l.b16 %v184
    %v224 = vunpack.c.l.b16 %v185
    %v225 = vunpack.c.l.b16 %v186
    %v226 = vunpack.c.l.b16 %v187
    %v227 = vunpack.c.l.b16 %v188
    %v228 = vunpack.c.l.b16 %v189
    %v229 = vunpack.c.l.b16 %v190
    %v230 = vunpack.c.l.b16 %v191
    %v231 = vunpack.c.l.b16 %v192
    %v232 = vunpack.c.l.b16 %v193
    %v233 = vunpack.c.l.b16 %v194
    %v234 = vunpack.c.l.b16 %v195
    %v235 = vunpack.c.l.b16 %v196
    %v236 = vpack.c.b16 %v221, %v220
    %v237 = vpack.c.b16 %v223, %v222
    %v238 = vpack.c.b16 %v225, %v224
    %v239 = vpack.c.b16 %v227, %v226
    %v240 = vpack.c.b16 %v229, %v228
    %v241 = vpack.c.b16 %v231, %v230
    %v242 = vpack.c.b16 %v233, %v232
    %v243 = vpack.c.b16 %v235, %v234
    %252 = vmatprep.subr.bf16.mxu0 0
    %253 = vmatpush1.bf16.msra.mxu0 %v236
    %254 = vmatprep.subr.bf16.mxu0 0
    %255 = vmatpush1.bf16.msra.mxu0 %v237
    %256 = vmatprep.subr.bf16.mxu0 0
    %257 = vmatpush1.bf16.msra.mxu0 %v238
    %258 = vmatprep.subr.bf16.mxu0 0
    %259 = vmatpush1.bf16.msra.mxu0 %v239
    %260 = vmatprep.subr.bf16.mxu0 0
    %261 = vmatpush1.bf16.msra.mxu0 %v240
    %262 = vmatprep.subr.bf16.mxu0 0
    %263 = vmatpush1.bf16.msra.mxu0 %v241
    %264 = vmatprep.subr.bf16.mxu0 0
    %265 = vmatpush1.bf16.msra.mxu0 %v242
    %266 = vmatprep.subr.bf16.mxu0 0
    %267 = vmatpush1.bf16.msra.mxu0 %v243
    %268 = vmatprep.subr.bf16.mxu0 0
    %269 = vmatpush1.bf16.msra.mxu0 0
    %270 = vmatprep.subr.bf16.mxu0 0
    %271 = vmatpush1.bf16.msra.mxu0 0
    %272 = vmatprep.subr.bf16.mxu0 0
    %273 = vmatpush1.bf16.msra.mxu0 0
    %274 = vmatprep.subr.bf16.mxu0 0
    %275 = vmatpush1.bf16.msra.mxu0 0
    %276 = vmatprep.subr.bf16.mxu0 0
    %277 = vmatpush1.bf16.msra.mxu0 0
    %278 = vmatprep.subr.bf16.mxu0 0
    %279 = vmatpush1.bf16.msra.mxu0 0
    %280 = vmatprep.subr.bf16.mxu0 0
    %281 = vmatpush1.bf16.msra.mxu0 0
    %282 = vmatprep.subr.bf16.mxu0 0
    %283 = vmatpush1.bf16.msra.mxu0 0
    %284 = vmatprep.mubr.bf16.mxu0 0
    %285 = vmatmul.mubr.bf16.gmra.mrb[0].mxu0 %v180
    %v286 = vpop.f32.mrb[0].mxu0
    %v287 = vadd.f32 %v202, %v286
    %v288 = vpop.f32.mrb[0].mxu0
    %v289 = vpop.f32.mrb[0].mxu0
    %v290 = vadd.f32 %v202, %v289
    %v291 = vpop.f32.mrb[0].mxu0
    %292 = vdwg.mxu0
    %v293 = vmax.f32 %v287, 0.0
    %v294 = vmax.f32 %v290, 0.0
    %s295 = sadd.s32 %s67, 1013904226
    %v296 = vstv %s295
    %v297 = vxor.u32 %v79, %v296
    %v298 = vxor.u32 %v80, %v296
    %v299 = vshrl.u32 %v297, 16
    %v300 = vshrl.u32 %v298, 16
    %v301 = vxor.u32 %v297, %v299
    %v302 = vxor.u32 %v298, %v300
    %v303 = vmul.u32 %v301, 73244475
    %v304 = vmul.u32 %v302, 73244475
    %v305 = vshrl.u32 %v303, 16
    %v306 = vshrl.u32 %v304, 16
    %v307 = vxor.u32 %v303, %v305
    %v308 = vxor.u32 %v304, %v306
    %v309 = vmul.u32 %v307, 73244475
    %v310 = vmul.u32 %v308, 73244475
    %v311 = vshrl.u32 %v309, 16
    %v312 = vshrl.u32 %v310, 16
    %v313 = vxor.u32 %v309, %v311
    %v314 = vxor.u32 %v310, %v312
    %v315 = vand.u32 %v313, 16777215
    %v316 = vand.u32 %v314, 16777215
    %vm317 = vcmp.ge.s32.totalorder %v315, 8388608
    %vm318 = vcmp.ge.s32.totalorder %v316, 8388608
    %v319 = vsel %vm317, %v293, 0.0
    %v320 = vsel %vm318, %v294, 0.0
    %321 = vst [vmem:[#allocation9] sm:$0xff] %v319
    %322 = vst [vmem:[#allocation9 + $0x8] sm:$0xff] %v320
    // Predicated region
    $region38: #{tpu_custom_call.1} parent=1 // pred_check
      _
    $region39: #{tpu_custom_call.1} parent=1 // pred_check_branch
      %324 = sbr.rel (0) target = $region41
    $region40: #{tpu_custom_call.1} parent=1 // pred_region
      %s326 = ssub.s32 256, 256
      %327 = vsyncadd [#allocation5], %s326
      %s328 = sshll.u32 [#allocation9], 4
      %s329 = int_to_ptr.vmem [resolvable:$true] %s328
      %334 = dma.vmem_to_hbm [thread:$0]  %s329, 256, %s6, [#allocation5], 128, 128, 8
    $region41: #{tpu_custom_call.1} parent=1 // pred_fallthru
      _
    // Predicated region
    $region42: #{tpu_custom_call.1} parent=1 // pred_check
      _
    $region43: #{tpu_custom_call.1} parent=1 // pred_check_branch
      %336 = sbr.rel (0) target = $region45
    $region44: #{tpu_custom_call.1} parent=1 // pred_region
      %337 = dma.done [#allocation5], 256
    $region45: #{tpu_custom_call.1} parent=1 // pred_fallthru
      _
    %338 = vsyncpa [#allocation4], 1
    %339 = vsyncpa [#allocation7], 1
    %340 = vsyncpa [#allocation5], 1

</llo_original>
